<compile_context>
chip_gen: v5e
topology: v5e:2x2
jax: 0.10.0
libtpu: 0.0.40
codegen_flags: <defaults>
</compile_context>

<pallas_src>
import functools

import jax
import jax.numpy as jnp
from jax import lax
from jax.experimental import pallas as pl
from jax.experimental.pallas import tpu as pltpu

_MASK_OFFSET = 100000.0


def _online_triplet_kernel(e1_ref, e2_ref, sq2_ref, labc_ref, labr_ref,
                           loss_ref, corr_ref, *, margin, eps):
    # e1_ref  : (TB, D) tile of anchor (second-half) embeddings, un-normalized
    # e2_ref  : (N, D)  first-half embeddings, ALREADY normalized (resident)
    # sq2_ref : (1, N)  squared row norms of the normalized first half (lane-dense)
    # labc_ref: (TB, 1) int32  label_ti2[i]  (first-half labels, per anchor row)
    # labr_ref: (1, N)  int32  label_ti[j]   (second-half labels, per column)
    x1 = e1_ref[...]
    if x1.dtype != jnp.float32:
        x1 = x1.astype(jnp.float32)

    # F.normalize(x, dim=1): x / max(||x||_2, eps)  (anchor tile only; column half
    # is normalized once in the wrapper).
    n1 = jnp.sqrt(jnp.sum(x1 * x1, axis=1, keepdims=True))
    x1 = x1 / jnp.maximum(n1, eps)

    # euclidean_dist: d2[i,j] = ||x1_i||^2 + ||x2_j||^2 - 2 * x1_i . x2_j
    sq1 = jnp.sum(x1 * x1, axis=1, keepdims=True)                     # (TB, 1)
    sq2 = sq2_ref[...]                                                # (1, N)
    g = lax.dot_general(x1, e2_ref[...], (((1,), (1,)), ((), ())),
                        preferred_element_type=jnp.float32)           # (TB, N) on MXU
    d = jnp.sqrt(jnp.maximum(sq1 + sq2 - 2.0 * g, 1e-12))

    # mat_sim[i,j] = (label_ti[j] == label_ti2[i]); boolean where-selects are
    # bit-identical to the reference's d ± 1e5*mask arithmetic.
    sim = labr_ref[...] == labc_ref[...]                              # (TB, N) bool
    hard_p = jnp.max(jnp.where(sim, d, d - _MASK_OFFSET), axis=1, keepdims=True)
    hard_n = jnp.min(jnp.where(sim, d + _MASK_OFFSET, d), axis=1, keepdims=True)

    # MarginRankingLoss(margin)(dist_an, dist_ap, y=1) per row, then reduce the
    # tile to partial sums so the stores are lane-dense unmasked full vregs.
    row_loss = jnp.maximum(hard_p - hard_n + jnp.float32(margin), 0.0)   # (TB,1)
    row_corr = (hard_n > hard_p).astype(jnp.float32)                     # (TB,1)
    part_loss = jnp.sum(row_loss, axis=0, keepdims=True)                 # (1,1)
    part_corr = jnp.sum(row_corr, axis=0, keepdims=True)                 # (1,1)
    loss_ref[...] = jnp.broadcast_to(part_loss, loss_ref.shape)          # (8,128)
    corr_ref[...] = jnp.broadcast_to(part_corr, corr_ref.shape)          # (8,128)


def _vmem_footprint(tb, n, d_model):
    """Conservative VMEM footprint estimate (bytes) for a given anchor tile."""
    f32 = 4
    total = 2 * n * d_model * f32          # resident normalized first half (pipeline bufs)
    total += 2 * 2 * n * f32               # sq2 row + label row
    total += 2 * tb * d_model * f32        # double-buffered anchor tile
    total += 2 * tb * f32                  # label column
    total += 2 * 2 * 8 * 128 * f32         # two (8,128) partial-sum outputs
    total += 5 * tb * n * f32              # live (TB,N) temporaries (gram, dist, masked)
    total += 2 * tb * d_model * f32        # normalized anchors + squares
    return total


def _choose_row_tile(n, d_model, budget_bytes):
    """Largest anchor-row tile (multiple of 8 dividing n, or n itself) whose
    estimated total VMEM footprint fits the budget; prefers >= 2 grid steps so
    the 'parallel' axis spans both TensorCores on v7x."""
    cands = [t for t in range(8, n + 1, 8) if n % t == 0]
    if not cands:
        cands = [n]
    cands = sorted(set(cands), reverse=True)
    multi = [t for t in cands if t <= n // 2]      # >= 2 grid steps when possible
    ordered = multi if multi else cands
    for t in ordered:
        if _vmem_footprint(t, n, d_model) <= budget_bytes:
            return t
    return ordered[-1]                              # smallest; vmem_limit gives headroom


def online_triplet_loss_single(embeddings, labels, batchsize, *,
                               margin=0.5, eps=1e-12, row_tile=None,
                               vmem_budget_bytes=28 * 1024 * 1024):
    """Pallas TPU implementation of OnlineTripletLoss_single.forward.

    embeddings: (B, D) float array, labels: (B,) int array, batchsize: int (even).
    Returns (loss, prec) scalars, matching the PyTorch module's returned values.
    """
    assert batchsize % 2 == 0 and batchsize >= 2
    half = batchsize // 2
    emb = embeddings.astype(jnp.float32)
    emb2 = emb[:half]                                # emb_ti2 (columns of mat_dist)
    emb1 = emb[half:batchsize]                       # emb_ti  (anchors / rows)
    lab2 = labels[:half].astype(jnp.int32)           # label_ti2
    lab1 = labels[half:batchsize].astype(jnp.int32)  # label_ti

    n, d_model = emb1.shape
    assert emb2.shape == (n, d_model)

    # Hoisted column-half work (done once, not per grid step): F.normalize and
    # the lane-dense squared-norm row.
    n2 = jnp.sqrt(jnp.sum(emb2 * emb2, axis=1, keepdims=True))
    e2n = emb2 / jnp.maximum(n2, eps)                # normalized first half
    sq2 = jnp.sum(e2n * e2n, axis=1, keepdims=True).T   # (1, N)

    tb = row_tile if row_tile is not None else _choose_row_tile(n, d_model,
                                                                vmem_budget_bytes)
    assert n % tb == 0 and (tb % 8 == 0 or tb == n), \
        "row tile must divide N and be a multiple of 8 (or N itself)"
    grid_n = n // tb

    lab_col = lab2.reshape(n, 1)                     # label_ti2[i] per anchor row
    lab_row = lab1.reshape(1, n)                     # label_ti[j]  per column

    kernel = functools.partial(_online_triplet_kernel,
                               margin=float(margin), eps=float(eps))

    footprint = _vmem_footprint(tb, n, d_model)
    vmem_limit = int(min(56 * 2**20, max(32 * 2**20, footprint + 8 * 2**20)))

    loss_parts, corr_parts = pl.pallas_call(
        kernel,
        out_shape=(jax.ShapeDtypeStruct((grid_n * 8, 128), jnp.float32),
                   jax.ShapeDtypeStruct((grid_n * 8, 128), jnp.float32)),
        grid_spec=pltpu.PrefetchScalarGridSpec(
            num_scalar_prefetch=0,
            grid=(grid_n,),
            in_specs=[
                pl.BlockSpec((tb, d_model), lambda i: (i, 0)),   # anchor tile
                pl.BlockSpec((n, d_model), lambda i: (0, 0)),    # normalized first half
                pl.BlockSpec((1, n), lambda i: (0, 0)),          # sq2 row (lane-dense)
                pl.BlockSpec((tb, 1), lambda i: (i, 0)),         # label_ti2 column
                pl.BlockSpec((1, n), lambda i: (0, 0)),          # label_ti row
            ],
            out_specs=[
                pl.BlockSpec((8, 128), lambda i: (i, 0)),        # per-tile loss sum
                pl.BlockSpec((8, 128), lambda i: (i, 0)),        # per-tile (an > ap) count
            ],
        ),
        compiler_params=pltpu.CompilerParams(
            dimension_semantics=("parallel",),   # independent row tiles -> megacore on v7x
            vmem_limit_bytes=vmem_limit,
        ),
    )(emb1, e2n, sq2, lab_col, lab_row)

    part_loss = loss_parts.reshape(grid_n, 8, 128)[:, 0, 0]       # (grid,)
    part_corr = corr_parts.reshape(grid_n, 8, 128)[:, 0, 0]       # (grid,)
    loss = jnp.sum(part_loss) / jnp.float32(n)
    loss = jnp.maximum(loss, jnp.float32(0.0))   # the `if loss < 0` clamp (no-op for relu mean)
    prec = jnp.sum(part_corr) / jnp.float32(n)
    return loss, prec
    # TODO(synk): normalize_feature=False path has no defined return in the
    # original PyTorch forward, so it is intentionally not implemented.


def _reference(embeddings, labels, batchsize, margin, eps=1e-12):
    """Pure-jnp mirror of the PyTorch forward (returned values only)."""
    norms = jnp.sqrt(jnp.sum(embeddings * embeddings, axis=1, keepdims=True))
    emb = embeddings / jnp.maximum(norms, eps)
    half = batchsize // 2
    lab2 = labels[:half]
    lab1 = labels[half:batchsize]
    e2 = emb[:half]
    e1 = emb[half:batchsize]
    xx = jnp.sum(e1 * e1, axis=1, keepdims=True)               # (N,1)
    yy = jnp.sum(e2 * e2, axis=1, keepdims=True).T             # (1,N)
    d = jnp.sqrt(jnp.clip(xx + yy - 2.0 * (e1 @ e2.T), 1e-12, None))
    sim = (lab1[None, :] == lab2[:, None]).astype(jnp.float32)  # sim[i,j]=(lab1[j]==lab2[i])
    hard_p = jnp.max(d - _MASK_OFFSET * (1.0 - sim), axis=1)
    hard_n = jnp.min(d + _MASK_OFFSET * sim, axis=1)
    loss = jnp.mean(jnp.maximum(hard_p - hard_n + margin, 0.0))
    loss = jnp.maximum(loss, 0.0)
    prec = jnp.sum((hard_n > hard_p).astype(jnp.float32)) / hard_p.shape[0]
    return loss, prec


if __name__ == "__main__":
    # Small deterministic example: batch=32 embeddings of hidden=32, 4 classes.
    B, D = 32, 32
    margin = 0.5

    key = jax.random.PRNGKey(0)
    ke, kl = jax.random.split(key)
    embeddings = jax.random.normal(ke, (B, D), dtype=jnp.float32)
    labels = jax.random.randint(kl, (B,), 0, 4, dtype=jnp.int32)

    ref_loss, ref_prec = _reference(embeddings, labels, B, margin)

    # Default path: auto tile (n=16 -> tile 8, 2 grid steps, "parallel" axis).
    loss, prec = online_triplet_loss_single(embeddings, labels, B, margin=margin)
    loss = jax.block_until_ready(loss)
    prec = jax.block_until_ready(prec)
    assert jnp.allclose(loss, ref_loss, rtol=1e-5, atol=1e-5), (loss, ref_loss)
    assert jnp.allclose(prec, ref_prec, rtol=1e-5, atol=1e-5), (prec, ref_prec)

    # Single-tile path (grid of 1) to exercise the full-half tile.
    loss_t, prec_t = online_triplet_loss_single(embeddings, labels, B,
                                                margin=margin, row_tile=B // 2)
    loss_t = jax.block_until_ready(loss_t)
    prec_t = jax.block_until_ready(prec_t)
    assert jnp.allclose(loss_t, ref_loss, rtol=1e-5, atol=1e-5), (loss_t, ref_loss)
    assert jnp.allclose(prec_t, ref_prec, rtol=1e-5, atol=1e-5), (prec_t, ref_prec)

    print("KERNEL_OK")
</pallas_src>

<mosaic_0001>
module attributes {stable_mosaic.version = 11 : i64} {
  func.func @_online_triplet_kernel(%arg0: i32, %arg1: memref<8x32xf32, #tpu.memory_space<vmem>>, %arg2: memref<16x32xf32, #tpu.memory_space<vmem>>, %arg3: memref<1x16xf32, #tpu.memory_space<vmem>>, %arg4: memref<8x1xi32, #tpu.memory_space<vmem>>, %arg5: memref<1x16xi32, #tpu.memory_space<vmem>>, %arg6: memref<8x128xf32, #tpu.memory_space<vmem>>, %arg7: memref<8x128xf32, #tpu.memory_space<vmem>>) attributes {dimension_semantics = [#tpu.dimension_semantics<parallel>], iteration_bounds = array<i64: 2>, scalar_prefetch = 0 : i64, scratch_operands = 0 : i64, tpu.core_type = #tpu.core_type<tc>, window_params = [{transform_indices = @transform_0, window_bounds = array<i64: 8, 32>}, {pipeline_mode = #tpu.pipeline_mode<synchronous>, transform_indices = @transform_1, window_bounds = array<i64: 16, 32>}, {pipeline_mode = #tpu.pipeline_mode<synchronous>, transform_indices = @transform_2, window_bounds = array<i64: 1, 16>}, {transform_indices = @transform_3, window_bounds = array<i64: 8, 1>}, {pipeline_mode = #tpu.pipeline_mode<synchronous>, transform_indices = @transform_4, window_bounds = array<i64: 1, 16>}, {transform_indices = @transform_5, window_bounds = array<i64: 8, 128>}, {transform_indices = @transform_6, window_bounds = array<i64: 8, 128>}]} {
    %c0 = arith.constant 0 : index
    %c0_0 = arith.constant 0 : index
    %0 = vector.load %arg1[%c0, %c0_0] : memref<8x32xf32, #tpu.memory_space<vmem>>, vector<8x32xf32>
    %1 = arith.mulf %0, %0 : vector<8x32xf32>
    %cst = arith.constant dense<0.000000e+00> : vector<8xf32>
    %2 = vector.multi_reduction <add>, %1, %cst [1] : vector<8x32xf32> to vector<8xf32>
    %3 = vector.shape_cast %2 : vector<8xf32> to vector<8x1xf32>
    %4 = math.sqrt %3 : vector<8x1xf32>
    %cst_1 = arith.constant 9.99999996E-13 : f32
    %5 = vector.broadcast %cst_1 : f32 to vector<8x1xf32>
    %6 = arith.maximumf %4, %5 : vector<8x1xf32>
    %7 = vector.broadcast %6 : vector<8x1xf32> to vector<8x32xf32>
    %8 = arith.divf %0, %7 : vector<8x32xf32>
    %9 = arith.mulf %8, %8 : vector<8x32xf32>
    %cst_2 = arith.constant dense<0.000000e+00> : vector<8xf32>
    %10 = vector.multi_reduction <add>, %9, %cst_2 [1] : vector<8x32xf32> to vector<8xf32>
    %11 = vector.shape_cast %10 : vector<8xf32> to vector<8x1xf32>
    %c0_3 = arith.constant 0 : index
    %c0_4 = arith.constant 0 : index
    %12 = vector.load %arg3[%c0_3, %c0_4] : memref<1x16xf32, #tpu.memory_space<vmem>>, vector<1x16xf32>
    %c0_5 = arith.constant 0 : index
    %c0_6 = arith.constant 0 : index
    %13 = vector.load %arg2[%c0_5, %c0_6] : memref<16x32xf32, #tpu.memory_space<vmem>>, vector<16x32xf32>
    %cst_7 = arith.constant dense<0.000000e+00> : vector<8x16xf32>
    %14 = tpu.matmul %8, %13, %cst_7 {dimension_numbers = #tpu.dot_dimension_numbers<[1], [1], [0], [0], [0, 0, 1, 0], [], []>} : vector<8x32xf32>, vector<16x32xf32>, vector<8x16xf32> -> vector<8x16xf32>
    %15 = vector.broadcast %11 : vector<8x1xf32> to vector<8x16xf32>
    %16 = vector.broadcast %12 : vector<1x16xf32> to vector<8x16xf32>
    %17 = arith.addf %15, %16 : vector<8x16xf32>
    %cst_8 = arith.constant 2.000000e+00 : f32
    %18 = vector.broadcast %cst_8 : f32 to vector<8x16xf32>
    %19 = arith.mulf %18, %14 : vector<8x16xf32>
    %20 = arith.subf %17, %19 : vector<8x16xf32>
    %cst_9 = arith.constant 9.99999996E-13 : f32
    %21 = vector.broadcast %cst_9 : f32 to vector<8x16xf32>
    %22 = arith.maximumf %20, %21 : vector<8x16xf32>
    %23 = math.sqrt %22 : vector<8x16xf32>
    %c0_10 = arith.constant 0 : index
    %c0_11 = arith.constant 0 : index
    %24 = vector.load %arg5[%c0_10, %c0_11] : memref<1x16xi32, #tpu.memory_space<vmem>>, vector<1x16xi32>
    %c0_12 = arith.constant 0 : index
    %c0_13 = arith.constant 0 : index
    %25 = vector.load %arg4[%c0_12, %c0_13] : memref<8x1xi32, #tpu.memory_space<vmem>>, vector<8x1xi32>
    %26 = vector.broadcast %24 : vector<1x16xi32> to vector<8x16xi32>
    %27 = vector.broadcast %25 : vector<8x1xi32> to vector<8x16xi32>
    %28 = arith.cmpi eq, %26, %27 : vector<8x16xi32>
    %cst_14 = arith.constant 1.000000e+05 : f32
    %29 = vector.broadcast %cst_14 : f32 to vector<8x16xf32>
    %30 = arith.subf %23, %29 : vector<8x16xf32>
    %31 = arith.select %28, %23, %30 : vector<8x16xi1>, vector<8x16xf32>
    %cst_15 = arith.constant dense<0xFF800000> : vector<8xf32>
    %32 = vector.multi_reduction <maximumf>, %31, %cst_15 [1] : vector<8x16xf32> to vector<8xf32>
    %33 = vector.shape_cast %32 : vector<8xf32> to vector<8x1xf32>
    %cst_16 = arith.constant 1.000000e+05 : f32
    %34 = vector.broadcast %cst_16 : f32 to vector<8x16xf32>
    %35 = arith.addf %23, %34 : vector<8x16xf32>
    %36 = arith.select %28, %35, %23 : vector<8x16xi1>, vector<8x16xf32>
    %cst_17 = arith.constant dense<0x7F800000> : vector<8xf32>
    %37 = vector.multi_reduction <minimumf>, %36, %cst_17 [1] : vector<8x16xf32> to vector<8xf32>
    %38 = vector.shape_cast %37 : vector<8xf32> to vector<8x1xf32>
    %39 = arith.subf %33, %38 : vector<8x1xf32>
    %cst_18 = arith.constant 5.000000e-01 : f32
    %40 = vector.broadcast %cst_18 : f32 to vector<8x1xf32>
    %41 = arith.addf %39, %40 : vector<8x1xf32>
    %cst_19 = arith.constant 0.000000e+00 : f32
    %42 = vector.broadcast %cst_19 : f32 to vector<8x1xf32>
    %43 = arith.maximumf %41, %42 : vector<8x1xf32>
    %44 = arith.cmpf ogt, %38, %33 : vector<8x1xf32>
    %45 = arith.extui %44 : vector<8x1xi1> to vector<8x1xi32>
    %46 = arith.sitofp %45 : vector<8x1xi32> to vector<8x1xf32>
    %cst_20 = arith.constant dense<0.000000e+00> : vector<1xf32>
    %47 = vector.multi_reduction <add>, %43, %cst_20 [0] : vector<8x1xf32> to vector<1xf32>
    %48 = vector.shape_cast %47 : vector<1xf32> to vector<1x1xf32>
    %cst_21 = arith.constant dense<0.000000e+00> : vector<1xf32>
    %49 = vector.multi_reduction <add>, %46, %cst_21 [0] : vector<8x1xf32> to vector<1xf32>
    %50 = vector.shape_cast %49 : vector<1xf32> to vector<1x1xf32>
    %51 = vector.shape_cast %48 : vector<1x1xf32> to vector<1x1xf32>
    %52 = vector.broadcast %51 : vector<1x1xf32> to vector<8x128xf32>
    %c0_22 = arith.constant 0 : index
    %c0_23 = arith.constant 0 : index
    %53 = vector.load %arg6[%c0_22, %c0_23] : memref<8x128xf32, #tpu.memory_space<vmem>>, vector<8x128xf32>
    tpu.vector_store %arg6[%c0_22, %c0_23], %52 {strides = array<i32>} : memref<8x128xf32, #tpu.memory_space<vmem>>, vector<8x128xf32>,
    %54 = vector.shape_cast %50 : vector<1x1xf32> to vector<1x1xf32>
    %55 = vector.broadcast %54 : vector<1x1xf32> to vector<8x128xf32>
    %c0_24 = arith.constant 0 : index
    %c0_25 = arith.constant 0 : index
    %56 = vector.load %arg7[%c0_24, %c0_25] : memref<8x128xf32, #tpu.memory_space<vmem>>, vector<8x128xf32>
    tpu.vector_store %arg7[%c0_24, %c0_25], %55 {strides = array<i32>} : memref<8x128xf32, #tpu.memory_space<vmem>>, vector<8x128xf32>,
    return
  }
  func.func @transform_0(%arg0: i32) -> (i32, i32) {
    %c0_i32 = arith.constant 0 : i32
    %c0_i32_0 = arith.constant 0 : i32
    return %arg0, %c0_i32 : i32, i32
  }
  func.func @transform_1(%arg0: i32) -> (i32, i32) {
    %c0_i32 = arith.constant 0 : i32
    %c0_i32_0 = arith.constant 0 : i32
    %c0_i32_1 = arith.constant 0 : i32
    return %c0_i32, %c0_i32_0 : i32, i32
  }
  func.func @transform_2(%arg0: i32) -> (i32, i32) {
    %c0_i32 = arith.constant 0 : i32
    %c0_i32_0 = arith.constant 0 : i32
    %c0_i32_1 = arith.constant 0 : i32
    return %c0_i32, %c0_i32_0 : i32, i32
  }
  func.func @transform_3(%arg0: i32) -> (i32, i32) {
    %c0_i32 = arith.constant 0 : i32
    %c0_i32_0 = arith.constant 0 : i32
    return %arg0, %c0_i32 : i32, i32
  }
  func.func @transform_4(%arg0: i32) -> (i32, i32) {
    %c0_i32 = arith.constant 0 : i32
    %c0_i32_0 = arith.constant 0 : i32
    %c0_i32_1 = arith.constant 0 : i32
    return %c0_i32, %c0_i32_0 : i32, i32
  }
  func.func @transform_5(%arg0: i32) -> (i32, i32) {
    %c0_i32 = arith.constant 0 : i32
    %c0_i32_0 = arith.constant 0 : i32
    return %arg0, %c0_i32 : i32, i32
  }
  func.func @transform_6(%arg0: i32) -> (i32, i32) {
    %c0_i32 = arith.constant 0 : i32
    %c0_i32_0 = arith.constant 0 : i32
    return %arg0, %c0_i32 : i32, i32
  }
}

</mosaic_0001>

<llo_original>
// kernel: tpu_custom_call.1
$region0: #{tpu_custom_call.1}
  #allocation0 [shape = 'u32[]', space=smem, size = 0x4, offset = 0x4, fixed_abs, tag = 'smem constant byte address 0x4 - core index']
  #allocation1 [shape = 'u32[72,128]{1,0:T(1,128)}', space=vmem, size = 0x9000, scoped, tag = 'internal scratch']
  %s0 = inlined_call_operand.vmem [shape: f32[16,32], index: 0, kind: input, shape index: {}]
  %s1 = inlined_call_operand.hbm [shape: f32[16,32], index: 1, kind: input, shape index: {}]
  %s2 = inlined_call_operand.vmem [shape: f32[1,16], index: 2, kind: input, shape index: {}]
  %s3 = inlined_call_operand.vmem [shape: s32[16,1], index: 3, kind: input, shape index: {}]
  %s4 = inlined_call_operand.vmem [shape: s32[1,16], index: 4, kind: input, shape index: {}]
  %s5 = inlined_call_operand.hbm [shape: f32[16,128], index: 5, kind: output, shape index: {0}]
  %s6 = inlined_call_operand.hbm [shape: f32[16,128], index: 6, kind: output, shape index: {1}]
  %7 = xla_tuple %s5, %s6
  %s8 = sld [smem:[#allocation0]]
  $region65: #{tpu_custom_call.1} parent=0
    _
  %s10 = ssub.s32 1, %s8
  %s11 = scalar_select 0, %s10, %s8
  $region1: #{tpu_custom_call.1} parent=0
    #allocation2 [shape = 'u8[8192]{0}', space=vmem, size = 0x2000, scoped, tag = 'input window, operand 1, single buffered']
    #allocation3 [shape = 's32[2]{0}', space=sflag, size = 0x8, scoped, tag = 'scoped memory for tpu_custom_call.1']
    #allocation4 [shape = 's32[2]{0}', space=sflag, size = 0x8, scoped, tag = 'scoped memory for tpu_custom_call.1']
    #allocation5 [shape = 'u8[8192]{0}', space=vmem, size = 0x2000, scoped, tag = 'output window, operand 0']
    #allocation6 [shape = 'u8[8192]{0}', space=vmem, size = 0x2000, scoped, tag = 'output window, operand 1']
    #allocation7 [shape = 's32[2]{0}', space=sflag, size = 0x8, scoped, tag = 'scoped memory for tpu_custom_call.1']
    %12 = vsyncpa [#allocation3], 0
    %13 = vsyncpa [#allocation4], 0
    %s14 = scalar_lea.sflag [#allocation4], 1
    %15 = vsyncpa %s14, 0
    %16 = vsyncpa [#allocation7], 0
    %s17 = scalar_lea.sflag [#allocation7], 1
    %18 = vsyncpa %s17, 0
    loop: start=0, step=1, limit=4
    $region2: #{tpu_custom_call.1} parent=1 // loop_pre_header
      _
    $region3: #{tpu_custom_call.1} parent=1 // loop_header
      %s20 = sphi 0, %s24
      %p21 = scmp.ge.s32.totalorder %s20, 4
      %s30 = sphi 0, %s32
      %s33 = sphi 0, %s30
      %s34 = sphi 0, %s33
      %s50 = sphi 0, %s34
      %s54 = sphi 0, %s54
      %s56 = sphi 0, %s54
      %s57 = sphi 0, %s56
      %s71 = sphi 0, %s57
      %s75 = sphi 0, %s75
      %s77 = sphi 0, %s75
      %s78 = sphi 0, %s77
      %s92 = sphi 0, %s78
      %s98 = sphi 0, %s100
      %s101 = sphi 0, %s98
      %s102 = sphi 0, %s101
      %s118 = sphi 0, %s102
      %s122 = sphi 0, %s122
      %s124 = sphi 0, %s122
      %s125 = sphi 0, %s124
      %s139 = sphi 0, %s125
      %s145 = sphi 0, %s147
      %s148 = sphi 0, %s145
      %s149 = sphi 0, %s148
      %s165 = sphi 0, %s149
      %s171 = sphi 0, %s173
      %s174 = sphi 0, %s171
      %s175 = sphi 0, %s174
      %s191 = sphi 0, %s175
    $region4: #{tpu_custom_call.1} parent=1 // loop_header_branch
      %23 = sbr.rel (%p21) target = $region8
    $region5: #{tpu_custom_call.1} parent=1 // loop_body
      %s25 = ssub.s32 %s20, 1
      %s26 = ssub.s32 %s20, 2
      %s27 = sadd.s32 %s20, 1
      %s28 = ssub.s32 %s20, %s27
      %p29 = scmp.eq.s32.totalorder %s28, 0
      %s31 = sadd.s32 %s30, 1
      %s32 = scalar_select %p29, %s30, %s31
      %p35 = pneg %p29
      %p36 = scmp.eq.s32.totalorder %s20, 1
      %p37 = por %p35, %p36
      %p38 = scmp.ne.s32.totalorder %s30, %s33
      %p39 = scmp.eq.s32.totalorder %s20, 0
      %p40 = por %p38, %p39
      %p41 = scmp.ne.s32.totalorder %s30, %s33
      %p42 = scmp.eq.s32.totalorder %s25, 1
      %p43 = por %p41, %p42
      %p44 = scmp.ne.s32.totalorder %s33, %s34
      %p45 = scmp.eq.s32.totalorder %s25, 0
      %p46 = por %p44, %p45
      %p47 = scmp.ne.s32.totalorder %s33, %s34
      %p48 = scmp.eq.s32.totalorder %s26, 1
      %p49 = por %p47, %p48
      %p51 = scmp.ne.s32.totalorder %s34, %s50
      %p52 = scmp.eq.s32.totalorder %s26, 0
      %p53 = por %p51, %p52
      %s55 = sadd.s32 %s54, 1
      %p58 = scmp.eq.s32.totalorder %s20, 1
      %p59 = scmp.ne.s32.totalorder %s54, %s56
      %p60 = scmp.eq.s32.totalorder %s20, 0
      %p61 = por %p59, %p60
      %p62 = scmp.ne.s32.totalorder %s54, %s56
      %p63 = scmp.eq.s32.totalorder %s25, 1
      %p64 = por %p62, %p63
      %p65 = scmp.ne.s32.totalorder %s56, %s57
      %p66 = scmp.eq.s32.totalorder %s25, 0
      %p67 = por %p65, %p66
      %p68 = scmp.ne.s32.totalorder %s56, %s57
      %p69 = scmp.eq.s32.totalorder %s26, 1
      %p70 = por %p68, %p69
      %p72 = scmp.ne.s32.totalorder %s57, %s71
      %p73 = scmp.eq.s32.totalorder %s26, 0
      %p74 = por %p72, %p73
      %s76 = sadd.s32 %s75, 1
      %p79 = scmp.eq.s32.totalorder %s20, 1
      %p80 = scmp.ne.s32.totalorder %s75, %s77
      %p81 = scmp.eq.s32.totalorder %s20, 0
      %p82 = por %p80, %p81
      %p83 = scmp.ne.s32.totalorder %s75, %s77
      %p84 = scmp.eq.s32.totalorder %s25, 1
      %p85 = por %p83, %p84
      %p86 = scmp.ne.s32.totalorder %s77, %s78
      %p87 = scmp.eq.s32.totalorder %s25, 0
      %p88 = por %p86, %p87
      %p89 = scmp.ne.s32.totalorder %s77, %s78
      %p90 = scmp.eq.s32.totalorder %s26, 1
      %p91 = por %p89, %p90
      %p93 = scmp.ne.s32.totalorder %s78, %s92
      %p94 = scmp.eq.s32.totalorder %s26, 0
      %p95 = por %p93, %p94
      %s96 = ssub.s32 %s20, %s27
      %p97 = scmp.eq.s32.totalorder %s96, 0
      %s99 = sadd.s32 %s98, 1
      %s100 = scalar_select %p97, %s98, %s99
      %p103 = pneg %p97
      %p104 = scmp.eq.s32.totalorder %s20, 1
      %p105 = por %p103, %p104
      %p106 = scmp.ne.s32.totalorder %s98, %s101
      %p107 = scmp.eq.s32.totalorder %s20, 0
      %p108 = por %p106, %p107
      %p109 = scmp.ne.s32.totalorder %s98, %s101
      %p110 = scmp.eq.s32.totalorder %s25, 1
      %p111 = por %p109, %p110
      %p112 = scmp.ne.s32.totalorder %s101, %s102
      %p113 = scmp.eq.s32.totalorder %s25, 0
      %p114 = por %p112, %p113
      %p115 = scmp.ne.s32.totalorder %s101, %s102
      %p116 = scmp.eq.s32.totalorder %s26, 1
      %p117 = por %p115, %p116
      %p119 = scmp.ne.s32.totalorder %s102, %s118
      %p120 = scmp.eq.s32.totalorder %s26, 0
      %p121 = por %p119, %p120
      %s123 = sadd.s32 %s122, 1
      %p126 = scmp.eq.s32.totalorder %s20, 1
      %p127 = scmp.ne.s32.totalorder %s122, %s124
      %p128 = scmp.eq.s32.totalorder %s20, 0
      %p129 = por %p127, %p128
      %p130 = scmp.ne.s32.totalorder %s122, %s124
      %p131 = scmp.eq.s32.totalorder %s25, 1
      %p132 = por %p130, %p131
      %p133 = scmp.ne.s32.totalorder %s124, %s125
      %p134 = scmp.eq.s32.totalorder %s25, 0
      %p135 = por %p133, %p134
      %p136 = scmp.ne.s32.totalorder %s124, %s125
      %p137 = scmp.eq.s32.totalorder %s26, 1
      %p138 = por %p136, %p137
      %p140 = scmp.ne.s32.totalorder %s125, %s139
      %p141 = scmp.eq.s32.totalorder %s26, 0
      %p142 = por %p140, %p141
      %s143 = ssub.s32 %s20, %s27
      %p144 = scmp.eq.s32.totalorder %s143, 0
      %s146 = sadd.s32 %s145, 1
      %s147 = scalar_select %p144, %s145, %s146
      %p150 = pneg %p144
      %p151 = scmp.eq.s32.totalorder %s20, 1
      %p152 = por %p150, %p151
      %p153 = scmp.ne.s32.totalorder %s145, %s148
      %p154 = scmp.eq.s32.totalorder %s20, 0
      %p155 = por %p153, %p154
      %p156 = scmp.ne.s32.totalorder %s145, %s148
      %p157 = scmp.eq.s32.totalorder %s25, 1
      %p158 = por %p156, %p157
      %p159 = scmp.ne.s32.totalorder %s148, %s149
      %p160 = scmp.eq.s32.totalorder %s25, 0
      %p161 = por %p159, %p160
      %p162 = scmp.ne.s32.totalorder %s148, %s149
      %p163 = scmp.eq.s32.totalorder %s26, 1
      %p164 = por %p162, %p163
      %p166 = scmp.ne.s32.totalorder %s149, %s165
      %p167 = scmp.eq.s32.totalorder %s26, 0
      %p168 = por %p166, %p167
      %s169 = ssub.s32 %s20, %s27
      %p170 = scmp.eq.s32.totalorder %s169, 0
      %s172 = sadd.s32 %s171, 1
      %s173 = scalar_select %p170, %s171, %s172
      %p176 = pneg %p170
      %p177 = scmp.eq.s32.totalorder %s20, 1
      %p178 = por %p176, %p177
      %p179 = scmp.ne.s32.totalorder %s171, %s174
      %p180 = scmp.eq.s32.totalorder %s20, 0
      %p181 = por %p179, %p180
      %p182 = scmp.ne.s32.totalorder %s171, %s174
      %p183 = scmp.eq.s32.totalorder %s25, 1
      %p184 = por %p182, %p183
      %p185 = scmp.ne.s32.totalorder %s174, %s175
      %p186 = scmp.eq.s32.totalorder %s25, 0
      %p187 = por %p185, %p186
      %p188 = scmp.ne.s32.totalorder %s174, %s175
      %p189 = scmp.eq.s32.totalorder %s26, 1
      %p190 = por %p188, %p189
      %p192 = scmp.ne.s32.totalorder %s175, %s191
      %p193 = scmp.eq.s32.totalorder %s26, 0
      %p194 = por %p192, %p193
      %p195 = scmp.le.s32.totalorder 1, %s20
      %p196 = scmp.lt.s32.totalorder %s20, 3
      %p197 = pnand %p195, %p196
      %p198 = pneg %p197
      // Predicated region
      $region9: #{tpu_custom_call.1} parent=5 // pred_check
        _
      $region10: #{tpu_custom_call.1} parent=5 // pred_check_branch
        %200 = sbr.rel (%p197) target = $region12
      $region11: #{tpu_custom_call.1} parent=5 // pred_region
        %s201 = ssub.s32 %s20, 1
        // Predicated region
        $region13: #{tpu_custom_call.1} parent=11 // pred_check
          %p202 = pneg %p67
        $region14: #{tpu_custom_call.1} parent=11 // pred_check_branch
          %204 = sbr.rel (%p202) target = $region16
        $region15: #{tpu_custom_call.1} parent=11 // pred_region
          %206 = vsyncadd [#allocation3], 0
          %s207 = sshll.u32 %s1, 4
          %s208 = int_to_ptr.hbm [resolvable:$true] %s207
          %s209 = sshll.u32 [#allocation2], 4
          %s210 = int_to_ptr.vmem [resolvable:$true] %s209
          %215 = dma.hbm_to_vmem [thread:$0]  %s208, 256, %s210, [#allocation3], 128, 128, 8
        $region16: #{tpu_custom_call.1} parent=11 // pred_fallthru
          _
        // Predicated region
        $region17: #{tpu_custom_call.1} parent=11 // pred_check
          %p216 = pneg %p88
        $region18: #{tpu_custom_call.1} parent=11 // pred_check_branch
          %218 = sbr.rel (%p216) target = $region20
        $region19: #{tpu_custom_call.1} parent=11 // pred_region
          _
        $region20: #{tpu_custom_call.1} parent=11 // pred_fallthru
          _
        // Predicated region
        $region21: #{tpu_custom_call.1} parent=11 // pred_check
          %p219 = pneg %p135
        $region22: #{tpu_custom_call.1} parent=11 // pred_check_branch
          %221 = sbr.rel (%p219) target = $region24
        $region23: #{tpu_custom_call.1} parent=11 // pred_region
          _
        $region24: #{tpu_custom_call.1} parent=11 // pred_fallthru
          _
      $region12: #{tpu_custom_call.1} parent=5 // pred_fallthru
        _
      %p222 = scmp.lt.s32.totalorder %s20, 2
      // Predicated region
      $region25: #{tpu_custom_call.1} parent=5 // pred_check
        %p223 = pneg %p222
      $region26: #{tpu_custom_call.1} parent=5 // pred_check_branch
        %225 = sbr.rel (%p223) target = $region28
      $region27: #{tpu_custom_call.1} parent=5 // pred_region
        // Predicated region
        $region29: #{tpu_custom_call.1} parent=27 // pred_check
          %p226 = pneg %p40
        $region30: #{tpu_custom_call.1} parent=27 // pred_check_branch
          %228 = sbr.rel (%p226) target = $region32
        $region31: #{tpu_custom_call.1} parent=27 // pred_region
          %p229 = scmp.lt.s32.totalorder %s20, 1
          %s230 = scalar_select %p229, %s20, 1
          %s231 = smul.addr %s230, 8
          %s232 = scalar_lea.vmem %s0, %s231
        $region32: #{tpu_custom_call.1} parent=27 // pred_fallthru
          _
        // Predicated region
        $region33: #{tpu_custom_call.1} parent=27 // pred_check
          %p233 = pneg %p108
        $region34: #{tpu_custom_call.1} parent=27 // pred_check_branch
          %235 = sbr.rel (%p233) target = $region36
        $region35: #{tpu_custom_call.1} parent=27 // pred_region
          %p236 = scmp.lt.s32.totalorder %s20, 1
          %s237 = scalar_select %p236, %s20, 1
          %s238 = smul.addr %s237, 8
          %s239 = scalar_lea.vmem %s3, %s238
        $region36: #{tpu_custom_call.1} parent=27 // pred_fallthru
          _
      $region28: #{tpu_custom_call.1} parent=5 // pred_fallthru
        _
      %p240 = scmp.le.s32.totalorder 1, %s20
      %p241 = scmp.lt.s32.totalorder %s20, 3
      %p242 = pnand %p240, %p241
      %p243 = pneg %p242
      // Predicated region
      $region37: #{tpu_custom_call.1} parent=5 // pred_check
        _
      $region38: #{tpu_custom_call.1} parent=5 // pred_check_branch
        %245 = sbr.rel (%p242) target = $region40
      $region39: #{tpu_custom_call.1} parent=5 // pred_region
        %s246 = ssub.s32 %s20, 1
        // Predicated region
        $region41: #{tpu_custom_call.1} parent=39 // pred_check
          %p247 = pneg %p67
        $region42: #{tpu_custom_call.1} parent=39 // pred_check_branch
          %249 = sbr.rel (%p247) target = $region44
        $region43: #{tpu_custom_call.1} parent=39 // pred_region
          %251 = dma.done [#allocation3], 256
        $region44: #{tpu_custom_call.1} parent=39 // pred_fallthru
          _
        %p252 = scmp.lt.s32.totalorder %s25, 1
        %s253 = scalar_select %p252, %s25, 1
        %s254 = smul.addr %s253, 8
        %s255 = scalar_lea.vmem %s0, %s254
        %p256 = pneg %p46
        %p257 = pneg %p43
        %p258 = pneg %p67
        %p259 = pneg %p64
        %p260 = pneg %p88
        %p261 = pneg %p85
        %p262 = scmp.lt.s32.totalorder %s25, 1
        %s263 = scalar_select %p262, %s25, 1
        %s264 = smul.addr %s263, 8
        %s265 = scalar_lea.vmem %s3, %s264
        %p266 = pneg %p114
        %p267 = pneg %p111
        %p268 = pneg %p135
        %p269 = pneg %p132
        %p270 = pneg %p161
        %p271 = pneg %p158
        %s272 = sand.u32 %s148, 1
        %s273 = scalar_lea.sflag [#allocation4], %s272
        %s274 = sand.u32 %s148, 1
        %s275 = smul.addr %s274, 8
        %s276 = scalar_lea.vmem [#allocation5], %s275
        %p277 = pneg %p187
        %p278 = pneg %p184
        %s279 = sand.u32 %s174, 1
        %s280 = scalar_lea.sflag [#allocation7], %s279
        %s281 = sand.u32 %s174, 1
        %s282 = smul.addr %s281, 8
        %s283 = scalar_lea.vmem [#allocation6], %s282
        %p284 = scmp.lt.s32.totalorder %s25, 1
        %s285 = scalar_select %p284, %s25, 1
        %s286 = smul.addr %s285, 8
        %s287 = scalar_lea.vmem %s0, %s286
        %p288 = scmp.lt.s32.totalorder %s25, 1
        %s289 = scalar_select %p288, %s25, 1
        %s290 = smul.addr %s289, 8
        %s291 = scalar_lea.vmem %s3, %s290
        %v292 = vld [vmem:[%s287] sm:$0xff]
        %v293 = vmul.f32 %v292, %v292
        %vm294 = vcmask 261120
        %v295 = vsel %vm294, %v293, 0.0
        %296 = vadd.xlane.f32.xlu0 %v295
        %v297 = vpop.xlane.xlu0 %296
        %v298 = vrsqrt.pop %v297
        %v299 = vmul.f32 %v298, %v297
        %v300 = vmul.f32 %v299, %v298
        %v301 = vmul.f32 0.5, %v300
        %v302 = vsub.f32 1.5, %v301
        %v303 = vmul.f32 %v298, %v302
        %v304 = vmul.f32 %v297, %v303
        %vm305 = vcmp.eq.f32.partialorder %v297, inf
        %v306 = vsel %vm305, %v297, %v304
        %vm307 = vcmp.eq.f32.partialorder %v297, 0.0
        %v308 = vand.u32 %v297, 2147483648
        %v309 = vsel %vm307, %v308, %v306
        %v310 = vmax.f32 %v309, 1e-12
        %v311 = vrcp.pop %v310
        %v312 = vmul.f32 %v310, %v311
        %v313 = vsub.f32 1.0, %v312
        %v314 = vmul.f32 %v311, %v313
        %v315 = vadd.f32 %v311, %v314
        %vm316 = vweird.f32 %v310
        %vm317 = vweird.f32 %v311
        %vm318 = vmor %vm316, %vm317
        %v319 = vsel %vm318, %v311, %v315
        %v320 = vand.u32 2147483647, %v310
        %vm321 = vcmp.eq.f32.partialorder %v320, 8.507059e+37
        %v322 = vand.u32 %v310, 2147483648
        %v323 = vor.u32 1.1754944e-38, %v322
        %v324 = vsel %vm321, %v323, %v319
        %v325 = vmul.f32 %v292, %v324
        %v326 = vmul.f32 %v325, %v325
        %v327 = vsel %vm294, %v326, 0.0
        %328 = vadd.xlane.f32.xlu0 %v327
        %v329 = vpop.xlane.xlu0 %328
        %v330 = vld [vmem:[%s2] sm:$0x1]
        %v331 = vld [vmem:[#allocation2] sm:$0xff]
        %v332 = vld [vmem:[#allocation2 + $0x8] sm:$0xff]
        %v334 = vsel %vm294, %v325, 0
        %v337 = vsel %vm294, %v331, 0
        %v340 = vsel %vm294, %v332, 0
        %342 = vmatpush.xpose.msra.mxu0 0.0
        %343 = vmatpush.xpose.msra.mxu0 0.0
        %344 = vmatpush.xpose.msra.mxu0 0.0
        %345 = vmatpush.xpose.msra.mxu0 0.0
        %346 = vmatpush.xpose.msra.mxu0 0.0
        %347 = vmatpush.xpose.msra.mxu0 0.0
        %348 = vmatpush.xpose.msra.mxu0 0.0
        %349 = vmatpush.xpose.msra.mxu0 0.0
        %350 = vmatpush.xpose.msra.mxu0 0.0
        %351 = vmatpush.xpose.msra.mxu0 0.0
        %352 = vmatpush.xpose.msra.mxu0 0.0
        %353 = vmatpush.xpose.msra.mxu0 0.0
        %354 = vmatpush.xpose.msra.mxu0 0.0
        %355 = vmatpush.xpose.msra.mxu0 0.0
        %356 = vmatpush.xpose.msra.mxu0 %v340
        %357 = vmatpush.xpose.msra.mxu0 %v337
        %358 = vmatmul.f32.gmra.mxu0 %v334
        %v359 = vpop.f32.mrf.mxu0
        %v360 = vadd.f32 0.0, %v359
        %361 = vdwg.mxu0
        %v363 = vperm.slane %v330, 0
        %v365 = vadd.f32 %v329, %v363
        %v366 = vmul.f32 %v360, 2.0
        %v367 = vsub.f32 %v365, %v366
        %v368 = vmax.f32 %v367, 1e-12
        %v369 = vrsqrt.pop %v368
        %v370 = vmul.f32 %v369, %v368
        %v371 = vmul.f32 %v370, %v369
        %v372 = vmul.f32 0.5, %v371
        %v373 = vsub.f32 1.5, %v372
        %v374 = vmul.f32 %v369, %v373
        %v375 = vmul.f32 %v368, %v374
        %vm376 = vcmp.eq.f32.partialorder %v368, inf
        %v377 = vsel %vm376, %v368, %v375
        %vm378 = vcmp.eq.f32.partialorder %v368, 0.0
        %v379 = vand.u32 %v368, 2147483648
        %v380 = vsel %vm378, %v379, %v377
        %v381 = vld [vmem:[%s4] sm:$0x1]
        %v382 = vld [vmem:[%s291] sm:$0xff]
        %v383 = vperm.slane %v381, 0
        %384 = vset.pattern.permute.xlu0 0
        %385 = vperm.xlu0 %384, %v382
        %v386 = vpop.permute.xlu0 %385
        %vm387 = vcmp.eq.s32.totalorder %v383, %v386
        %v388 = vsub.f32 %v380, 100000.0
        %v389 = vsel %vm387, %v380, %v388
        %vm390 = vcmask 130048
        %v391 = vsel %vm390, %v389, -inf
        %392 = vmax.xlane.f32.xlu0 %v391
        %v393 = vpop.xlane.xlu0 %392
        %v394 = vadd.f32 %v380, 100000.0
        %v395 = vsel %vm387, %v394, %v380
        %v396 = vsel %vm390, %v395, inf
        %397 = vmin.xlane.f32.xlu0 %v396
        %v398 = vpop.xlane.xlu0 %397
        %v399 = vsub.f32 %v393, %v398
        %v400 = vadd.f32 %v399, 0.5
        %v401 = vmax.f32 %v400, 0.0
        %vm402 = vcmp.gt.f32.partialorder %v398, %v393
        %v403 = vsel %vm402, 1, 0
        %v404 = vcvt.s32.f32 %v403
        %v405 = vrot.slane %v401, 4
        %v406 = vadd.f32 %v401, %v405
        %v407 = vrot.slane %v406, 2
        %v408 = vadd.f32 %v406, %v407
        %v409 = vrot.slane %v408, 1
        %v410 = vadd.f32 %v408, %v409
        %v411 = vrot.slane %v404, 4
        %v412 = vadd.f32 %v404, %v411
        %v413 = vrot.slane %v412, 2
        %v414 = vadd.f32 %v412, %v413
        %v415 = vrot.slane %v414, 1
        %v416 = vadd.f32 %v414, %v415
        %417 = vst [vmem:[%s276] sm:$0xff] %v410
        %418 = vst [vmem:[%s283] sm:$0xff] %v416
        %s419 = sand.u32 %s148, 1
        %s420 = scalar_lea.sflag [#allocation4], %s419
        %s421 = sand.u32 %s148, 1
        %s422 = smul.addr %s421, 8
        %s423 = scalar_lea.vmem [#allocation5], %s422
        %s424 = sand.u32 %s174, 1
        %s425 = scalar_lea.sflag [#allocation7], %s424
        %s426 = sand.u32 %s174, 1
        %s427 = smul.addr %s426, 8
        %s428 = scalar_lea.vmem [#allocation6], %s427
        // Predicated region
        $region45: #{tpu_custom_call.1} parent=39 // pred_check
          %p429 = pneg %p158
        $region46: #{tpu_custom_call.1} parent=39 // pred_check_branch
          %431 = sbr.rel (%p429) target = $region48
        $region47: #{tpu_custom_call.1} parent=39 // pred_region
          %433 = vsyncadd %s420, 0
          %s434 = smul.addr %s25, 8
          %s435 = scalar_lea.hbm %s5, %s434
          %s437 = sshll.u32 %s423, 4
          %s438 = int_to_ptr.vmem [resolvable:$true] %s437
          %s439 = sshll.u32 %s435, 4
          %s440 = int_to_ptr.hbm [resolvable:$true] %s439
          %442 = dma.vmem_to_hbm [thread:$0]  %s438, 128, %s440, %s420
        $region48: #{tpu_custom_call.1} parent=39 // pred_fallthru
          _
        // Predicated region
        $region49: #{tpu_custom_call.1} parent=39 // pred_check
          %p443 = pneg %p184
        $region50: #{tpu_custom_call.1} parent=39 // pred_check_branch
          %445 = sbr.rel (%p443) target = $region52
        $region51: #{tpu_custom_call.1} parent=39 // pred_region
          %447 = vsyncadd %s425, 0
          %s448 = smul.addr %s25, 8
          %s449 = scalar_lea.hbm %s6, %s448
          %s451 = sshll.u32 %s428, 4
          %s452 = int_to_ptr.vmem [resolvable:$true] %s451
          %s453 = sshll.u32 %s449, 4
          %s454 = int_to_ptr.hbm [resolvable:$true] %s453
          %456 = dma.vmem_to_hbm [thread:$0]  %s452, 128, %s454, %s425
        $region52: #{tpu_custom_call.1} parent=39 // pred_fallthru
          _
      $region40: #{tpu_custom_call.1} parent=5 // pred_fallthru
        _
      %p457 = scmp.le.s32.totalorder 2, %s20
      // Predicated region
      $region53: #{tpu_custom_call.1} parent=5 // pred_check
        %p458 = pneg %p457
      $region54: #{tpu_custom_call.1} parent=5 // pred_check_branch
        %460 = sbr.rel (%p458) target = $region56
      $region55: #{tpu_custom_call.1} parent=5 // pred_region
        %s461 = ssub.s32 %s20, 2
        // Predicated region
        $region57: #{tpu_custom_call.1} parent=55 // pred_check
          %p462 = pneg %p164
        $region58: #{tpu_custom_call.1} parent=55 // pred_check_branch
          %464 = sbr.rel (%p462) target = $region60
        $region59: #{tpu_custom_call.1} parent=55 // pred_region
          %s465 = sand.u32 %s149, 1
          %s466 = scalar_lea.sflag [#allocation4], %s465
          %s467 = sand.u32 %s149, 1
          %s468 = smul.addr %s467, 8
          %s469 = scalar_lea.vmem [#allocation5], %s468
          %471 = dma.done %s466, 128
        $region60: #{tpu_custom_call.1} parent=55 // pred_fallthru
          _
        // Predicated region
        $region61: #{tpu_custom_call.1} parent=55 // pred_check
          %p472 = pneg %p190
        $region62: #{tpu_custom_call.1} parent=55 // pred_check_branch
          %474 = sbr.rel (%p472) target = $region64
        $region63: #{tpu_custom_call.1} parent=55 // pred_region
          %s475 = sand.u32 %s175, 1
          %s476 = scalar_lea.sflag [#allocation7], %s475
          %s477 = sand.u32 %s175, 1
          %s478 = smul.addr %s477, 8
          %s479 = scalar_lea.vmem [#allocation6], %s478
          %481 = dma.done %s476, 128
        $region64: #{tpu_custom_call.1} parent=55 // pred_fallthru
          _
      $region56: #{tpu_custom_call.1} parent=5 // pred_fallthru
        _
    $region6: #{tpu_custom_call.1} parent=1 // loop_footer
      %s24 = sadd.s32 1, %s20
    $region7: #{tpu_custom_call.1} parent=1 // loop_footer_branch
      %19 = sbr.rel target = $region3
    $region8: #{tpu_custom_call.1} parent=1 // loop_exit
      _
    %482 = vsyncpa [#allocation3], 1
    %s483 = scalar_lea.sflag [#allocation3], 1
    %484 = vsyncpa %s483, 1
    %485 = vsyncpa [#allocation4], 1
    %s486 = scalar_lea.sflag [#allocation4], 1
    %487 = vsyncpa %s486, 1
    %488 = vsyncpa [#allocation7], 1
    %s489 = scalar_lea.sflag [#allocation7], 1
    %490 = vsyncpa %s489, 1

</llo_original>
